<compile_context>
chip_gen: v6e
topology: v6e:2x2x1
jax: 0.10.0
libtpu: 0.0.40
codegen_flags: <defaults>
</compile_context>

<pallas_src>
import math
import jax
import jax.numpy as jnp
from jax.experimental import pallas as pl
from jax.experimental.pallas import tpu as pltpu

H = 32        # hidden_size
V = 128       # vocab size (decoder output dim)
B = 2
S = 8
EPS = 1e-12   # BertLayerNorm eps

_TILE_CAP = 4096   # rows; ~768 B/row working set -> << scoped VMEM everywhere


def _gelu(x):
    # exact (erf-based) BERT gelu — matches table_bert's gelu()
    return x * 0.5 * (1.0 + jax.lax.erf(x * (1.0 / math.sqrt(2.0))))


def _layer_norm_fused(x, gamma, beta):
    # Single pass over x: E[x] and E[x^2] together; var = E[x^2] - E[x]^2.
    mu = jnp.mean(x, axis=-1, keepdims=True)
    mu2 = jnp.mean(x * x, axis=-1, keepdims=True)
    var = jnp.maximum(mu2 - mu * mu, 0.0)
    xhat = (x - mu) * jax.lax.rsqrt(var + EPS)   # rsqrt -> EUP slot
    return gamma * xhat + beta


def _layer_norm_ref(x, gamma, beta):
    # canonical two-pass formula (matches BertLayerNorm) — reference only
    mu = jnp.mean(x, axis=-1, keepdims=True)
    var = jnp.mean((x - mu) ** 2, axis=-1, keepdims=True)
    return gamma * ((x - mu) * jax.lax.rsqrt(var + EPS)) + beta


def span_pred_kernel(span_ref, pos_ref, whh_ref, vec_ref, wd_ref, bd_ref, out_ref):
    span = span_ref[...].astype(jnp.float32)
    pos = pos_ref[...].astype(jnp.float32)

    vecs = vec_ref[...]          # (8, H): g1, b1, g2, b2, bt, g3, b3, <pad>
    g1, b1 = vecs[0:1, :], vecs[1:2, :]
    g2, b2 = vecs[2:3, :], vecs[3:4, :]
    bt = vecs[4:5, :]
    g3, b3 = vecs[5:6, :], vecs[6:7, :]

    # dense1: concat([span, pos]) @ W1  ==  span @ W1[:H] + pos @ W1[H:]
    # (two K=H dots accumulate; no concatenated activation ever hits HBM)
    h = (jnp.dot(span, whh_ref[0], preferred_element_type=jnp.float32)
         + jnp.dot(pos, whh_ref[1], preferred_element_type=jnp.float32))
    h = _layer_norm_fused(_gelu(h), g1, b1)

    # dense2 (no bias) + gelu + LN2
    t = jnp.dot(h, whh_ref[2], preferred_element_type=jnp.float32)
    t = _layer_norm_fused(_gelu(t), g2, b2)

    # BertLMPredictionHead.transform: dense (with bias) + gelu + LN
    t2 = jnp.dot(t, whh_ref[3], preferred_element_type=jnp.float32) + bt
    t2 = _layer_norm_fused(_gelu(t2), g3, b3)

    # decoder: t2 @ Wd + bias  (V = 128 -> lane-dense, unmasked stores)
    scores = jnp.dot(t2, wd_ref[...], preferred_element_type=jnp.float32) + bd_ref[...]
    out_ref[...] = scores.astype(out_ref.dtype)


def _choose_tile_n(n):
    """Row tile for the grid.

    * If the whole problem fits under the cap -> single grid step (tile_n = n):
      the grid is a sequential loop, so extra steps at tiny N only add
      pipeline prologue/step overhead.  (Only split for v7x core-parallelism
      when each shard carries thousands of rows of work.)
    * For large N, the biggest sublane-aligned divisor <= cap; if none exists
      the wrapper pads N up to a multiple of the cap.
    """
    if n <= _TILE_CAP:
        return n
    for t in range(_TILE_CAP, 0, -8):
        if n % t == 0:
            return t
    return _TILE_CAP   # no aligned divisor: wrapper pads


def span_based_prediction(span, pos, params, *, tile_n=None):
    """span, pos: [N, H] float32.  Returns [N, V] float32 scores."""
    N = span.shape[0]
    if tile_n is None:
        tile_n = _choose_tile_n(N)

    # Pad ragged N up to a multiple of tile_n (padding rows are dead work but
    # keep BlockSpecs rectangular); slice the output back afterwards.
    n_pad = (-N) % tile_n
    if n_pad:
        span = jnp.pad(span, ((0, n_pad), (0, 0)))
        pos = jnp.pad(pos, ((0, n_pad), (0, 0)))
    Np = N + n_pad

    (whh, vecs, wd, bd) = params

    in_specs = [
        pl.BlockSpec((tile_n, H), lambda i: (i, 0)),        # span tile
        pl.BlockSpec((tile_n, H), lambda i: (i, 0)),        # pos tile
        pl.BlockSpec((4, H, H), lambda i: (0, 0, 0)),       # [W1_span, W1_pos, W2, Wt]
        pl.BlockSpec((8, H), lambda i: (0, 0)),             # gamma/beta/bias slab
        pl.BlockSpec((H, V), lambda i: (0, 0)),             # Wd
        pl.BlockSpec((1, V), lambda i: (0, 0)),             # bd
    ]
    out_specs = pl.BlockSpec((tile_n, V), lambda i: (i, 0))

    # Advisory cost hint so XLA can schedule/overlap this small custom call.
    flops = 2 * Np * H * (4 * H + V)                          # four HxH-ish dots + decoder
    transcendentals = 3 * Np * H + 3 * Np                     # erf per LN input + rsqrt per row
    bytes_accessed = (Np * (2 * H + V) + 4 * H * H + 8 * H + H * V + V) * 4
    cost = pl.CostEstimate(flops=flops, transcendentals=transcendentals,
                           bytes_accessed=bytes_accessed)

    out = pl.pallas_call(
        span_pred_kernel,
        out_shape=jax.ShapeDtypeStruct((Np, V), jnp.float32),
        grid=(Np // tile_n,),
        in_specs=in_specs,
        out_specs=out_specs,
        compiler_params=pltpu.CompilerParams(dimension_semantics=("parallel",)),
        cost_estimate=cost,
    )(span, pos, whh, vecs, wd, bd)

    return out[:N] if n_pad else out


def make_params(key):
    """Deterministic synthetic parameters, matching the PyTorch module shapes
    (weights stored pre-transposed to (in, out))."""
    ks = jax.random.split(key, 5)
    scale = 0.02
    # dense1: Linear(2H -> H, bias=False); stored (2H, H), split into two (H, H) halves
    w1 = scale * jax.random.normal(ks[0], (2 * H, H), jnp.float32)
    w1_span, w1_pos = w1[:H], w1[H:]
    # dense2: Linear(H -> H, bias=False); transform.dense: Linear(H -> H, bias=True)
    w2 = scale * jax.random.normal(ks[1], (H, H), jnp.float32)
    wt = scale * jax.random.normal(ks[2], (H, H), jnp.float32)
    bt = scale * jax.random.normal(ks[3], (H,), jnp.float32)
    # LayerNorm params (gamma=1, beta=0 at init, like BertLayerNorm)
    g1 = jnp.ones((H,), jnp.float32); b1 = jnp.zeros((H,), jnp.float32)
    g2 = jnp.ones((H,), jnp.float32); b2 = jnp.zeros((H,), jnp.float32)
    g3 = jnp.ones((H,), jnp.float32); b3 = jnp.zeros((H,), jnp.float32)
    # decoder: weight tied to embedding table (V, H) -> stored (H, V), plus bias (V,)
    wd = scale * jax.random.normal(ks[4], (H, V), jnp.float32)
    bd = jnp.zeros((1, V), jnp.float32)

    whh = jnp.stack([w1_span, w1_pos, w2, wt])                        # (4, H, H)
    vecs = jnp.stack([g1, b1, g2, b2, bt, g3, b3,
                      jnp.zeros((H,), jnp.float32)])                  # (8, H), row 7 pad
    return (whh, vecs, wd, bd)


def reference(span, pos, params):
    (whh, vecs, wd, bd) = params
    g1, b1, g2, b2, bt, g3, b3 = (vecs[i] for i in range(7))
    h = _layer_norm_ref(_gelu(span @ whh[0] + pos @ whh[1]), g1, b1)
    t = _layer_norm_ref(_gelu(h @ whh[2]), g2, b2)
    t2 = _layer_norm_ref(_gelu(t @ whh[3] + bt), g3, b3)
    return t2 @ wd + bd


if __name__ == "__main__":
    key = jax.random.PRNGKey(0)
    k_span, k_pos, k_par = jax.random.split(key, 3)

    span_rep = jax.random.normal(k_span, (B, S, H), jnp.float32)
    pos_emb = jax.random.normal(k_pos, (B, S, H), jnp.float32)
    params = make_params(k_par)

    span_flat = span_rep.reshape(B * S, H)
    pos_flat = pos_emb.reshape(B * S, H)

    scores_flat = span_based_prediction(span_flat, pos_flat, params)
    scores = scores_flat.reshape(B, S, V)
    jax.block_until_ready(scores)

    ref = reference(span_flat, pos_flat, params).reshape(B, S, V)
    assert jnp.allclose(scores, ref, rtol=1e-5, atol=1e-5), "mismatch vs JAX reference"

    print("KERNEL_OK")
</pallas_src>

<mosaic_0001>
module attributes {stable_mosaic.version = 11 : i64} {
  func.func @span_pred_kernel(%arg0: i32, %arg1: memref<16x32xf32, #tpu.memory_space<vmem>>, %arg2: memref<16x32xf32, #tpu.memory_space<vmem>>, %arg3: memref<4x32x32xf32, #tpu.memory_space<vmem>>, %arg4: memref<8x32xf32, #tpu.memory_space<vmem>>, %arg5: memref<32x128xf32, #tpu.memory_space<vmem>>, %arg6: memref<1x128xf32, #tpu.memory_space<vmem>>, %arg7: memref<16x128xf32, #tpu.memory_space<vmem>>) attributes {dimension_semantics = [#tpu.dimension_semantics<parallel>], iteration_bounds = array<i64: 1>, scalar_prefetch = 0 : i64, scratch_operands = 0 : i64, tpu.core_type = #tpu.core_type<tc>, window_params = [{transform_indices = @transform_0, window_bounds = array<i64: 16, 32>}, {transform_indices = @transform_1, window_bounds = array<i64: 16, 32>}, {pipeline_mode = #tpu.pipeline_mode<synchronous>, transform_indices = @transform_2, window_bounds = array<i64: 4, 32, 32>}, {pipeline_mode = #tpu.pipeline_mode<synchronous>, transform_indices = @transform_3, window_bounds = array<i64: 8, 32>}, {pipeline_mode = #tpu.pipeline_mode<synchronous>, transform_indices = @transform_4, window_bounds = array<i64: 32, 128>}, {pipeline_mode = #tpu.pipeline_mode<synchronous>, transform_indices = @transform_5, window_bounds = array<i64: 1, 128>}, {transform_indices = @transform_6, window_bounds = array<i64: 16, 128>}]} {
    %c0 = arith.constant 0 : index
    %c0_0 = arith.constant 0 : index
    %0 = vector.load %arg1[%c0, %c0_0] : memref<16x32xf32, #tpu.memory_space<vmem>>, vector<16x32xf32>
    %c0_1 = arith.constant 0 : index
    %c0_2 = arith.constant 0 : index
    %1 = vector.load %arg2[%c0_1, %c0_2] : memref<16x32xf32, #tpu.memory_space<vmem>>, vector<16x32xf32>
    %c0_3 = arith.constant 0 : index
    %c0_4 = arith.constant 0 : index
    %2 = vector.load %arg4[%c0_3, %c0_4] : memref<8x32xf32, #tpu.memory_space<vmem>>, vector<8x32xf32>
    %3 = vector.extract_strided_slice %2 {offsets = [0, 0], sizes = [1, 32], strides = [1, 1]} : vector<8x32xf32> to vector<1x32xf32>
    %4 = vector.extract_strided_slice %2 {offsets = [1, 0], sizes = [1, 32], strides = [1, 1]} : vector<8x32xf32> to vector<1x32xf32>
    %5 = vector.extract_strided_slice %2 {offsets = [2, 0], sizes = [1, 32], strides = [1, 1]} : vector<8x32xf32> to vector<1x32xf32>
    %6 = vector.extract_strided_slice %2 {offsets = [3, 0], sizes = [1, 32], strides = [1, 1]} : vector<8x32xf32> to vector<1x32xf32>
    %7 = vector.extract_strided_slice %2 {offsets = [4, 0], sizes = [1, 32], strides = [1, 1]} : vector<8x32xf32> to vector<1x32xf32>
    %8 = vector.extract_strided_slice %2 {offsets = [5, 0], sizes = [1, 32], strides = [1, 1]} : vector<8x32xf32> to vector<1x32xf32>
    %9 = vector.extract_strided_slice %2 {offsets = [6, 0], sizes = [1, 32], strides = [1, 1]} : vector<8x32xf32> to vector<1x32xf32>
    %c0_5 = arith.constant 0 : index
    %c0_6 = arith.constant 0 : index
    %c0_7 = arith.constant 0 : index
    %10 = vector.load %arg3[%c0_5, %c0_6, %c0_7] : memref<4x32x32xf32, #tpu.memory_space<vmem>>, vector<1x32x32xf32>
    %11 = vector.shape_cast %10 : vector<1x32x32xf32> to vector<32x32xf32>
    %cst = arith.constant dense<0.000000e+00> : vector<16x32xf32>
    %12 = tpu.matmul %0, %11, %cst {dimension_numbers = #tpu.dot_dimension_numbers<[1], [0], [0], [1], [0, 0, 1, 1], [], []>} : vector<16x32xf32>, vector<32x32xf32>, vector<16x32xf32> -> vector<16x32xf32>
    %c1 = arith.constant 1 : index
    %c0_8 = arith.constant 0 : index
    %c0_9 = arith.constant 0 : index
    %13 = vector.load %arg3[%c1, %c0_8, %c0_9] : memref<4x32x32xf32, #tpu.memory_space<vmem>>, vector<1x32x32xf32>
    %14 = vector.shape_cast %13 : vector<1x32x32xf32> to vector<32x32xf32>
    %cst_10 = arith.constant dense<0.000000e+00> : vector<16x32xf32>
    %15 = tpu.matmul %1, %14, %cst_10 {dimension_numbers = #tpu.dot_dimension_numbers<[1], [0], [0], [1], [0, 0, 1, 1], [], []>} : vector<16x32xf32>, vector<32x32xf32>, vector<16x32xf32> -> vector<16x32xf32>
    %16 = arith.addf %12, %15 : vector<16x32xf32>
    %cst_11 = arith.constant 5.000000e-01 : f32
    %17 = vector.broadcast %cst_11 : f32 to vector<16x32xf32>
    %18 = arith.mulf %16, %17 : vector<16x32xf32>
    %cst_12 = arith.constant 0.707106769 : f32
    %19 = vector.broadcast %cst_12 : f32 to vector<16x32xf32>
    %20 = arith.mulf %16, %19 : vector<16x32xf32>
    %21 = math.erf %20 : vector<16x32xf32>
    %cst_13 = arith.constant 1.000000e+00 : f32
    %22 = vector.broadcast %cst_13 : f32 to vector<16x32xf32>
    %23 = arith.addf %22, %21 : vector<16x32xf32>
    %24 = arith.mulf %18, %23 : vector<16x32xf32>
    %cst_14 = arith.constant dense<0.000000e+00> : vector<16xf32>
    %25 = vector.multi_reduction <add>, %24, %cst_14 [1] : vector<16x32xf32> to vector<16xf32>
    %26 = vector.shape_cast %25 : vector<16xf32> to vector<16x1xf32>
    %cst_15 = arith.constant 3.200000e+01 : f32
    %27 = vector.broadcast %cst_15 : f32 to vector<16x1xf32>
    %28 = arith.divf %26, %27 : vector<16x1xf32>
    %29 = arith.mulf %24, %24 : vector<16x32xf32>
    %cst_16 = arith.constant dense<0.000000e+00> : vector<16xf32>
    %30 = vector.multi_reduction <add>, %29, %cst_16 [1] : vector<16x32xf32> to vector<16xf32>
    %31 = vector.shape_cast %30 : vector<16xf32> to vector<16x1xf32>
    %cst_17 = arith.constant 3.200000e+01 : f32
    %32 = vector.broadcast %cst_17 : f32 to vector<16x1xf32>
    %33 = arith.divf %31, %32 : vector<16x1xf32>
    %34 = arith.mulf %28, %28 : vector<16x1xf32>
    %35 = arith.subf %33, %34 : vector<16x1xf32>
    %cst_18 = arith.constant 0.000000e+00 : f32
    %36 = vector.broadcast %cst_18 : f32 to vector<16x1xf32>
    %37 = arith.maximumf %35, %36 : vector<16x1xf32>
    %38 = vector.broadcast %28 : vector<16x1xf32> to vector<16x32xf32>
    %39 = arith.subf %24, %38 : vector<16x32xf32>
    %cst_19 = arith.constant 9.99999996E-13 : f32
    %40 = vector.broadcast %cst_19 : f32 to vector<16x1xf32>
    %41 = arith.addf %37, %40 : vector<16x1xf32>
    %42 = math.rsqrt %41 : vector<16x1xf32>
    %43 = vector.broadcast %42 : vector<16x1xf32> to vector<16x32xf32>
    %44 = arith.mulf %39, %43 : vector<16x32xf32>
    %45 = vector.broadcast %3 : vector<1x32xf32> to vector<16x32xf32>
    %46 = arith.mulf %45, %44 : vector<16x32xf32>
    %47 = vector.broadcast %4 : vector<1x32xf32> to vector<16x32xf32>
    %48 = arith.addf %46, %47 : vector<16x32xf32>
    %c2 = arith.constant 2 : index
    %c0_20 = arith.constant 0 : index
    %c0_21 = arith.constant 0 : index
    %49 = vector.load %arg3[%c2, %c0_20, %c0_21] : memref<4x32x32xf32, #tpu.memory_space<vmem>>, vector<1x32x32xf32>
    %50 = vector.shape_cast %49 : vector<1x32x32xf32> to vector<32x32xf32>
    %cst_22 = arith.constant dense<0.000000e+00> : vector<16x32xf32>
    %51 = tpu.matmul %48, %50, %cst_22 {dimension_numbers = #tpu.dot_dimension_numbers<[1], [0], [0], [1], [0, 0, 1, 1], [], []>} : vector<16x32xf32>, vector<32x32xf32>, vector<16x32xf32> -> vector<16x32xf32>
    %cst_23 = arith.constant 5.000000e-01 : f32
    %52 = vector.broadcast %cst_23 : f32 to vector<16x32xf32>
    %53 = arith.mulf %51, %52 : vector<16x32xf32>
    %cst_24 = arith.constant 0.707106769 : f32
    %54 = vector.broadcast %cst_24 : f32 to vector<16x32xf32>
    %55 = arith.mulf %51, %54 : vector<16x32xf32>
    %56 = math.erf %55 : vector<16x32xf32>
    %cst_25 = arith.constant 1.000000e+00 : f32
    %57 = vector.broadcast %cst_25 : f32 to vector<16x32xf32>
    %58 = arith.addf %57, %56 : vector<16x32xf32>
    %59 = arith.mulf %53, %58 : vector<16x32xf32>
    %cst_26 = arith.constant dense<0.000000e+00> : vector<16xf32>
    %60 = vector.multi_reduction <add>, %59, %cst_26 [1] : vector<16x32xf32> to vector<16xf32>
    %61 = vector.shape_cast %60 : vector<16xf32> to vector<16x1xf32>
    %cst_27 = arith.constant 3.200000e+01 : f32
    %62 = vector.broadcast %cst_27 : f32 to vector<16x1xf32>
    %63 = arith.divf %61, %62 : vector<16x1xf32>
    %64 = arith.mulf %59, %59 : vector<16x32xf32>
    %cst_28 = arith.constant dense<0.000000e+00> : vector<16xf32>
    %65 = vector.multi_reduction <add>, %64, %cst_28 [1] : vector<16x32xf32> to vector<16xf32>
    %66 = vector.shape_cast %65 : vector<16xf32> to vector<16x1xf32>
    %cst_29 = arith.constant 3.200000e+01 : f32
    %67 = vector.broadcast %cst_29 : f32 to vector<16x1xf32>
    %68 = arith.divf %66, %67 : vector<16x1xf32>
    %69 = arith.mulf %63, %63 : vector<16x1xf32>
    %70 = arith.subf %68, %69 : vector<16x1xf32>
    %cst_30 = arith.constant 0.000000e+00 : f32
    %71 = vector.broadcast %cst_30 : f32 to vector<16x1xf32>
    %72 = arith.maximumf %70, %71 : vector<16x1xf32>
    %73 = vector.broadcast %63 : vector<16x1xf32> to vector<16x32xf32>
    %74 = arith.subf %59, %73 : vector<16x32xf32>
    %cst_31 = arith.constant 9.99999996E-13 : f32
    %75 = vector.broadcast %cst_31 : f32 to vector<16x1xf32>
    %76 = arith.addf %72, %75 : vector<16x1xf32>
    %77 = math.rsqrt %76 : vector<16x1xf32>
    %78 = vector.broadcast %77 : vector<16x1xf32> to vector<16x32xf32>
    %79 = arith.mulf %74, %78 : vector<16x32xf32>
    %80 = vector.broadcast %5 : vector<1x32xf32> to vector<16x32xf32>
    %81 = arith.mulf %80, %79 : vector<16x32xf32>
    %82 = vector.broadcast %6 : vector<1x32xf32> to vector<16x32xf32>
    %83 = arith.addf %81, %82 : vector<16x32xf32>
    %c3 = arith.constant 3 : index
    %c0_32 = arith.constant 0 : index
    %c0_33 = arith.constant 0 : index
    %84 = vector.load %arg3[%c3, %c0_32, %c0_33] : memref<4x32x32xf32, #tpu.memory_space<vmem>>, vector<1x32x32xf32>
    %85 = vector.shape_cast %84 : vector<1x32x32xf32> to vector<32x32xf32>
    %cst_34 = arith.constant dense<0.000000e+00> : vector<16x32xf32>
    %86 = tpu.matmul %83, %85, %cst_34 {dimension_numbers = #tpu.dot_dimension_numbers<[1], [0], [0], [1], [0, 0, 1, 1], [], []>} : vector<16x32xf32>, vector<32x32xf32>, vector<16x32xf32> -> vector<16x32xf32>
    %87 = vector.broadcast %7 : vector<1x32xf32> to vector<16x32xf32>
    %88 = arith.addf %86, %87 : vector<16x32xf32>
    %cst_35 = arith.constant 5.000000e-01 : f32
    %89 = vector.broadcast %cst_35 : f32 to vector<16x32xf32>
    %90 = arith.mulf %88, %89 : vector<16x32xf32>
    %cst_36 = arith.constant 0.707106769 : f32
    %91 = vector.broadcast %cst_36 : f32 to vector<16x32xf32>
    %92 = arith.mulf %88, %91 : vector<16x32xf32>
    %93 = math.erf %92 : vector<16x32xf32>
    %cst_37 = arith.constant 1.000000e+00 : f32
    %94 = vector.broadcast %cst_37 : f32 to vector<16x32xf32>
    %95 = arith.addf %94, %93 : vector<16x32xf32>
    %96 = arith.mulf %90, %95 : vector<16x32xf32>
    %cst_38 = arith.constant dense<0.000000e+00> : vector<16xf32>
    %97 = vector.multi_reduction <add>, %96, %cst_38 [1] : vector<16x32xf32> to vector<16xf32>
    %98 = vector.shape_cast %97 : vector<16xf32> to vector<16x1xf32>
    %cst_39 = arith.constant 3.200000e+01 : f32
    %99 = vector.broadcast %cst_39 : f32 to vector<16x1xf32>
    %100 = arith.divf %98, %99 : vector<16x1xf32>
    %101 = arith.mulf %96, %96 : vector<16x32xf32>
    %cst_40 = arith.constant dense<0.000000e+00> : vector<16xf32>
    %102 = vector.multi_reduction <add>, %101, %cst_40 [1] : vector<16x32xf32> to vector<16xf32>
    %103 = vector.shape_cast %102 : vector<16xf32> to vector<16x1xf32>
    %cst_41 = arith.constant 3.200000e+01 : f32
    %104 = vector.broadcast %cst_41 : f32 to vector<16x1xf32>
    %105 = arith.divf %103, %104 : vector<16x1xf32>
    %106 = arith.mulf %100, %100 : vector<16x1xf32>
    %107 = arith.subf %105, %106 : vector<16x1xf32>
    %cst_42 = arith.constant 0.000000e+00 : f32
    %108 = vector.broadcast %cst_42 : f32 to vector<16x1xf32>
    %109 = arith.maximumf %107, %108 : vector<16x1xf32>
    %110 = vector.broadcast %100 : vector<16x1xf32> to vector<16x32xf32>
    %111 = arith.subf %96, %110 : vector<16x32xf32>
    %cst_43 = arith.constant 9.99999996E-13 : f32
    %112 = vector.broadcast %cst_43 : f32 to vector<16x1xf32>
    %113 = arith.addf %109, %112 : vector<16x1xf32>
    %114 = math.rsqrt %113 : vector<16x1xf32>
    %115 = vector.broadcast %114 : vector<16x1xf32> to vector<16x32xf32>
    %116 = arith.mulf %111, %115 : vector<16x32xf32>
    %117 = vector.broadcast %8 : vector<1x32xf32> to vector<16x32xf32>
    %118 = arith.mulf %117, %116 : vector<16x32xf32>
    %119 = vector.broadcast %9 : vector<1x32xf32> to vector<16x32xf32>
    %120 = arith.addf %118, %119 : vector<16x32xf32>
    %c0_44 = arith.constant 0 : index
    %c0_45 = arith.constant 0 : index
    %121 = vector.load %arg5[%c0_44, %c0_45] : memref<32x128xf32, #tpu.memory_space<vmem>>, vector<32x128xf32>
    %cst_46 = arith.constant dense<0.000000e+00> : vector<16x128xf32>
    %122 = tpu.matmul %120, %121, %cst_46 {dimension_numbers = #tpu.dot_dimension_numbers<[1], [0], [0], [1], [0, 0, 1, 1], [], []>} : vector<16x32xf32>, vector<32x128xf32>, vector<16x128xf32> -> vector<16x128xf32>
    %c0_47 = arith.constant 0 : index
    %c0_48 = arith.constant 0 : index
    %123 = vector.load %arg6[%c0_47, %c0_48] : memref<1x128xf32, #tpu.memory_space<vmem>>, vector<1x128xf32>
    %124 = vector.broadcast %123 : vector<1x128xf32> to vector<16x128xf32>
    %125 = arith.addf %122, %124 : vector<16x128xf32>
    %c0_49 = arith.constant 0 : index
    %c0_50 = arith.constant 0 : index
    %126 = vector.load %arg7[%c0_49, %c0_50] : memref<16x128xf32, #tpu.memory_space<vmem>>, vector<16x128xf32>
    tpu.vector_store %arg7[%c0_49, %c0_50], %125 {strides = array<i32>} : memref<16x128xf32, #tpu.memory_space<vmem>>, vector<16x128xf32>,
    return
  }
  func.func @transform_0(%arg0: i32) -> (i32, i32) {
    %c0_i32 = arith.constant 0 : i32
    %c0_i32_0 = arith.constant 0 : i32
    return %arg0, %c0_i32 : i32, i32
  }
  func.func @transform_1(%arg0: i32) -> (i32, i32) {
    %c0_i32 = arith.constant 0 : i32
    %c0_i32_0 = arith.constant 0 : i32
    return %arg0, %c0_i32 : i32, i32
  }
  func.func @transform_2(%arg0: i32) -> (i32, i32, i32) {
    %c0_i32 = arith.constant 0 : i32
    %c0_i32_0 = arith.constant 0 : i32
    %c0_i32_1 = arith.constant 0 : i32
    %c0_i32_2 = arith.constant 0 : i32
    return %c0_i32, %c0_i32_0, %c0_i32_1 : i32, i32, i32
  }
  func.func @transform_3(%arg0: i32) -> (i32, i32) {
    %c0_i32 = arith.constant 0 : i32
    %c0_i32_0 = arith.constant 0 : i32
    %c0_i32_1 = arith.constant 0 : i32
    return %c0_i32, %c0_i32_0 : i32, i32
  }
  func.func @transform_4(%arg0: i32) -> (i32, i32) {
    %c0_i32 = arith.constant 0 : i32
    %c0_i32_0 = arith.constant 0 : i32
    %c0_i32_1 = arith.constant 0 : i32
    return %c0_i32, %c0_i32_0 : i32, i32
  }
  func.func @transform_5(%arg0: i32) -> (i32, i32) {
    %c0_i32 = arith.constant 0 : i32
    %c0_i32_0 = arith.constant 0 : i32
    %c0_i32_1 = arith.constant 0 : i32
    return %c0_i32, %c0_i32_0 : i32, i32
  }
  func.func @transform_6(%arg0: i32) -> (i32, i32) {
    %c0_i32 = arith.constant 0 : i32
    %c0_i32_0 = arith.constant 0 : i32
    return %arg0, %c0_i32 : i32, i32
  }
}

</mosaic_0001>

<llo_original>
// kernel: tpu_custom_call.1
$region0: #{tpu_custom_call.1}
  #allocation0 [shape = 'u32[]', space=smem, size = 0x4, offset = 0x4, fixed_abs, tag = 'smem constant byte address 0x4 - core index']
  #allocation1 [shape = 'u32[144,128]{1,0:T(1,128)}', space=vmem, size = 0x12000, scoped, tag = 'internal scratch']
  %s0 = inlined_call_operand.hbm [shape: f32[16,32], index: 0, kind: input, shape index: {}]
  %s1 = inlined_call_operand.hbm [shape: f32[16,32], index: 1, kind: input, shape index: {}]
  %s2 = inlined_call_operand.hbm [shape: f32[4,32,32], index: 2, kind: input, shape index: {}]
  %s3 = inlined_call_operand.hbm [shape: f32[8,32], index: 3, kind: input, shape index: {}]
  %s4 = inlined_call_operand.hbm [shape: f32[32,128], index: 4, kind: input, shape index: {}]
  %s5 = inlined_call_operand.vmem [shape: f32[1,128], index: 5, kind: input, shape index: {}]
  %s6 = inlined_call_operand.hbm [shape: f32[16,128], index: 6, kind: output, shape index: {}]
  %s7 = sld [smem:[#allocation0]]
  $region54: #{tpu_custom_call.1} parent=0
    _
  %s9 = ssub.s32 1, %s7
  %s10 = scalar_select 0, %s9, %s7
  $region1: #{tpu_custom_call.1} parent=0
    #allocation2 [shape = 'u8[8192]{0}', space=vmem, size = 0x2000, scoped, tag = 'input window, operand 0, single buffered']
    #allocation3 [shape = 's32[1]{0}', space=sflag, size = 0x4, scoped, tag = 'scoped memory for tpu_custom_call.1']
    #allocation4 [shape = 's32[1]{0}', space=sflag, size = 0x4, scoped, tag = 'scoped memory for tpu_custom_call.1']
    #allocation5 [shape = 'u8[8192]{0}', space=vmem, size = 0x2000, scoped, tag = 'input window, operand 1, single buffered']
    #allocation6 [shape = 's32[1]{0}', space=sflag, size = 0x4, scoped, tag = 'scoped memory for tpu_custom_call.1']
    #allocation7 [shape = 'u8[65536]{0}', space=vmem, size = 0x10000, scoped, tag = 'input window, operand 2, single buffered']
    #allocation8 [shape = 'u8[4096]{0}', space=vmem, size = 0x1000, scoped, tag = 'input window, operand 3, single buffered']
    #allocation9 [shape = 's32[1]{0}', space=sflag, size = 0x4, scoped, tag = 'scoped memory for tpu_custom_call.1']
    #allocation10 [shape = 'u8[16384]{0}', space=vmem, size = 0x4000, scoped, tag = 'input window, operand 4, single buffered']
    #allocation11 [shape = 'u8[8192]{0}', space=vmem, size = 0x2000, scoped, tag = 'output window, operand 0, single buffered']
    %11 = vsyncpa [#allocation3], 0
    %12 = vsyncpa [#allocation6], 0
    %13 = vsyncpa [#allocation9], 0
    %14 = vsyncpa [#allocation4], 0
    // Predicated region
    $region2: #{tpu_custom_call.1} parent=1 // pred_check
      _
    $region3: #{tpu_custom_call.1} parent=1 // pred_check_branch
      %16 = sbr.rel (0) target = $region5
    $region4: #{tpu_custom_call.1} parent=1 // pred_region
      %s18 = ssub.s32 256, 256
      %19 = vsyncadd [#allocation3], %s18
      %s20 = sshll.u32 [#allocation2], 4
      %s21 = int_to_ptr.vmem [resolvable:$true] %s20
      %26 = dma.hbm_to_vmem [thread:$0]  %s0, 256, %s21, [#allocation3], 128, 128, 8
    $region5: #{tpu_custom_call.1} parent=1 // pred_fallthru
      _
    // Predicated region
    $region6: #{tpu_custom_call.1} parent=1 // pred_check
      _
    $region7: #{tpu_custom_call.1} parent=1 // pred_check_branch
      %28 = sbr.rel (0) target = $region9
    $region8: #{tpu_custom_call.1} parent=1 // pred_region
      %s30 = ssub.s32 256, 256
      %31 = vsyncadd [#allocation6], %s30
      %s32 = sshll.u32 [#allocation5], 4
      %s33 = int_to_ptr.vmem [resolvable:$true] %s32
      %38 = dma.hbm_to_vmem [thread:$0]  %s1, 256, %s33, [#allocation6], 128, 128, 8
    $region9: #{tpu_custom_call.1} parent=1 // pred_fallthru
      _
    // Predicated region
    $region10: #{tpu_custom_call.1} parent=1 // pred_check
      _
    $region11: #{tpu_custom_call.1} parent=1 // pred_check_branch
      %40 = sbr.rel (0) target = $region13
    $region12: #{tpu_custom_call.1} parent=1 // pred_region
      %s42 = ssub.s32 2048, 2048
      %43 = vsyncadd [#allocation6], %s42
      %s44 = sshll.u32 [#allocation7], 4
      %s45 = int_to_ptr.vmem [resolvable:$true] %s44
      %50 = dma.hbm_to_vmem [thread:$0]  %s2, 2048, %s45, [#allocation6], 128, 128, 8
    $region13: #{tpu_custom_call.1} parent=1 // pred_fallthru
      _
    // Predicated region
    $region14: #{tpu_custom_call.1} parent=1 // pred_check
      _
    $region15: #{tpu_custom_call.1} parent=1 // pred_check_branch
      %52 = sbr.rel (0) target = $region17
    $region16: #{tpu_custom_call.1} parent=1 // pred_region
      %s54 = ssub.s32 128, 128
      %55 = vsyncadd [#allocation9], %s54
      %s57 = sshll.u32 [#allocation8], 4
      %s58 = int_to_ptr.vmem [resolvable:$true] %s57
      %60 = dma.hbm_to_vmem [thread:$0]  %s3, 128, %s58, [#allocation9]
    $region17: #{tpu_custom_call.1} parent=1 // pred_fallthru
      _
    // Predicated region
    $region18: #{tpu_custom_call.1} parent=1 // pred_check
      _
    $region19: #{tpu_custom_call.1} parent=1 // pred_check_branch
      %62 = sbr.rel (0) target = $region21
    $region20: #{tpu_custom_call.1} parent=1 // pred_region
      %s64 = ssub.s32 512, 512
      %65 = vsyncadd [#allocation9], %s64
      %s66 = sshll.u32 [#allocation10], 4
      %s67 = int_to_ptr.vmem [resolvable:$true] %s66
      %72 = dma.hbm_to_vmem [thread:$0]  %s4, 512, %s67, [#allocation9], 128, 128, 8
    $region21: #{tpu_custom_call.1} parent=1 // pred_fallthru
      _
    // Predicated region
    $region22: #{tpu_custom_call.1} parent=1 // pred_check
      _
    $region23: #{tpu_custom_call.1} parent=1 // pred_check_branch
      %74 = sbr.rel (0) target = $region25
    $region24: #{tpu_custom_call.1} parent=1 // pred_region
      _
    $region25: #{tpu_custom_call.1} parent=1 // pred_fallthru
      _
    // Predicated region
    $region26: #{tpu_custom_call.1} parent=1 // pred_check
      _
    $region27: #{tpu_custom_call.1} parent=1 // pred_check_branch
      %76 = sbr.rel (0) target = $region29
    $region28: #{tpu_custom_call.1} parent=1 // pred_region
      %77 = dma.done [#allocation3], 256
    $region29: #{tpu_custom_call.1} parent=1 // pred_fallthru
      _
    // Predicated region
    $region30: #{tpu_custom_call.1} parent=1 // pred_check
      _
    $region31: #{tpu_custom_call.1} parent=1 // pred_check_branch
      %79 = sbr.rel (0) target = $region33
    $region32: #{tpu_custom_call.1} parent=1 // pred_region
      %80 = dma.done [#allocation6], 256
    $region33: #{tpu_custom_call.1} parent=1 // pred_fallthru
      _
    // Predicated region
    $region34: #{tpu_custom_call.1} parent=1 // pred_check
      _
    $region35: #{tpu_custom_call.1} parent=1 // pred_check_branch
      %82 = sbr.rel (0) target = $region37
    $region36: #{tpu_custom_call.1} parent=1 // pred_region
      %83 = dma.done [#allocation6], 2048
    $region37: #{tpu_custom_call.1} parent=1 // pred_fallthru
      _
    // Predicated region
    $region38: #{tpu_custom_call.1} parent=1 // pred_check
      _
    $region39: #{tpu_custom_call.1} parent=1 // pred_check_branch
      %85 = sbr.rel (0) target = $region41
    $region40: #{tpu_custom_call.1} parent=1 // pred_region
      %86 = dma.done [#allocation9], 128
    $region41: #{tpu_custom_call.1} parent=1 // pred_fallthru
      _
    // Predicated region
    $region42: #{tpu_custom_call.1} parent=1 // pred_check
      _
    $region43: #{tpu_custom_call.1} parent=1 // pred_check_branch
      %88 = sbr.rel (0) target = $region45
    $region44: #{tpu_custom_call.1} parent=1 // pred_region
      %89 = dma.done [#allocation9], 512
    $region45: #{tpu_custom_call.1} parent=1 // pred_fallthru
      _
    %v90 = vld [vmem:[#allocation2] sm:$0xff]
    %v91 = vld [vmem:[#allocation2 + $0x8] sm:$0xff]
    %v92 = vld [vmem:[#allocation5] sm:$0xff]
    %v93 = vld [vmem:[#allocation5 + $0x8] sm:$0xff]
    %v94 = vld [vmem:[#allocation8] sm:$0xff]
    %v95 = vld [vmem:[#allocation7] sm:$0xff]
    %v96 = vld [vmem:[#allocation7 + $0x8] sm:$0xff]
    %v97 = vld [vmem:[#allocation7 + $0x10] sm:$0xff]
    %v98 = vld [vmem:[#allocation7 + $0x18] sm:$0xff]
    %s99 = scalar_lea.vmem [#allocation7], 32
    %v100 = vld [vmem:[%s99] sm:$0xff]
    %v101 = vld [vmem:[%s99 + $0x8] sm:$0xff]
    %v102 = vld [vmem:[%s99 + $0x10] sm:$0xff]
    %v103 = vld [vmem:[%s99 + $0x18] sm:$0xff]
    %vm104 = vcmask 261120
    %v106 = vsel %vm104, %v92, 0
    %v109 = vsel %vm104, %v93, 0
    %111 = vmatprep.subr.mxu0 0.0
    %112 = vmatpush1.msra.mxu0 0.0
    %113 = vmatprep.subr.mxu0 0.0
    %114 = vmatpush1.msra.mxu0 0.0
    %115 = vmatprep.subr.mxu0 0.0
    %116 = vmatpush1.msra.mxu0 0.0
    %117 = vmatprep.subr.mxu0 0.0
    %118 = vmatpush1.msra.mxu0 0.0
    %119 = vmatprep.subr.mxu0 0.0
    %120 = vmatpush1.msra.mxu0 0.0
    %121 = vmatprep.subr.mxu0 0.0
    %122 = vmatpush1.msra.mxu0 0.0
    %123 = vmatprep.subr.mxu0 0.0
    %124 = vmatpush1.msra.mxu0 0.0
    %125 = vmatprep.subr.mxu0 0.0
    %126 = vmatpush1.msra.mxu0 0.0
    %127 = vmatprep.subr.mxu0 0.0
    %128 = vmatpush1.msra.mxu0 0.0
    %129 = vmatprep.subr.mxu0 0.0
    %130 = vmatpush1.msra.mxu0 0.0
    %131 = vmatprep.subr.mxu0 0.0
    %132 = vmatpush1.msra.mxu0 0.0
    %133 = vmatprep.subr.mxu0 0.0
    %134 = vmatpush1.msra.mxu0 0.0
    %135 = vmatprep.subr.mxu0 0.0
    %136 = vmatpush1.msra.mxu0 %v103
    %137 = vmatprep.subr.mxu0 0.0
    %138 = vmatpush1.msra.mxu0 %v102
    %139 = vmatprep.subr.mxu0 0.0
    %140 = vmatpush1.msra.mxu0 %v101
    %141 = vmatprep.subr.mxu0 0.0
    %142 = vmatpush1.msra.mxu0 %v100
    %143 = vmatprep.subr.mxu0 0.0
    %144 = vmatpush2.msra.mxu0 0.0
    %145 = vmatprep.subr.mxu0 0.0
    %146 = vmatpush2.msra.mxu0 0.0
    %147 = vmatprep.subr.mxu0 0.0
    %148 = vmatpush2.msra.mxu0 0.0
    %149 = vmatprep.subr.mxu0 0.0
    %150 = vmatpush2.msra.mxu0 0.0
    %151 = vmatprep.subr.mxu0 0.0
    %152 = vmatpush2.msra.mxu0 0.0
    %153 = vmatprep.subr.mxu0 0.0
    %154 = vmatpush2.msra.mxu0 0.0
    %155 = vmatprep.subr.mxu0 0.0
    %156 = vmatpush2.msra.mxu0 0.0
    %157 = vmatprep.subr.mxu0 0.0
    %158 = vmatpush2.msra.mxu0 0.0
    %159 = vmatprep.subr.mxu0 0.0
    %160 = vmatpush2.msra.mxu0 0.0
    %161 = vmatprep.subr.mxu0 0.0
    %162 = vmatpush2.msra.mxu0 0.0
    %163 = vmatprep.subr.mxu0 0.0
    %164 = vmatpush2.msra.mxu0 0.0
    %165 = vmatprep.subr.mxu0 0.0
    %166 = vmatpush2.msra.mxu0 0.0
    %167 = vmatprep.subr.mxu0 0.0
    %168 = vmatpush2.msra.mxu0 0.0
    %169 = vmatprep.subr.mxu0 0.0
    %170 = vmatpush2.msra.mxu0 0.0
    %171 = vmatprep.subr.mxu0 0.0
    %172 = vmatpush2.msra.mxu0 0.0
    %173 = vmatprep.subr.mxu0 0.0
    %174 = vmatpush2.msra.mxu0 0.0
    %175 = vmatprep.mubr.f32.mxu0 0.0
    %176 = vmatmul.mubr.f32.gmra.mxu0 %v106
    %v177 = vpop.f32.mrf.mxu0
    %v178 = vadd.f32 0.0, %v177
    %v179 = vpop.f32.mrf.mxu0
    %180 = vmatprep.mubr.f32.mxu0 0.0
    %181 = vmatmul.mubr.f32.gmra.mxu0 %v109
    %v182 = vpop.f32.mrf.mxu0
    %v183 = vadd.f32 0.0, %v182
    %v184 = vpop.f32.mrf.mxu0
    %185 = vdwg.mxu0
    %v187 = vsel %vm104, %v90, 0
    %v190 = vsel %vm104, %v91, 0
    %192 = vmatprep.subr.mxu0 0.0
    %193 = vmatpush1.msra.mxu0 0.0
    %194 = vmatprep.subr.mxu0 0.0
    %195 = vmatpush1.msra.mxu0 0.0
    %196 = vmatprep.subr.mxu0 0.0
    %197 = vmatpush1.msra.mxu0 0.0
    %198 = vmatprep.subr.mxu0 0.0
    %199 = vmatpush1.msra.mxu0 0.0
    %200 = vmatprep.subr.mxu0 0.0
    %201 = vmatpush1.msra.mxu0 0.0
    %202 = vmatprep.subr.mxu0 0.0
    %203 = vmatpush1.msra.mxu0 0.0
    %204 = vmatprep.subr.mxu0 0.0
    %205 = vmatpush1.msra.mxu0 0.0
    %206 = vmatprep.subr.mxu0 0.0
    %207 = vmatpush1.msra.mxu0 0.0
    %208 = vmatprep.subr.mxu0 0.0
    %209 = vmatpush1.msra.mxu0 0.0
    %210 = vmatprep.subr.mxu0 0.0
    %211 = vmatpush1.msra.mxu0 0.0
    %212 = vmatprep.subr.mxu0 0.0
    %213 = vmatpush1.msra.mxu0 0.0
    %214 = vmatprep.subr.mxu0 0.0
    %215 = vmatpush1.msra.mxu0 0.0
    %216 = vmatprep.subr.mxu0 0.0
    %217 = vmatpush1.msra.mxu0 %v98
    %218 = vmatprep.subr.mxu0 0.0
    %219 = vmatpush1.msra.mxu0 %v97
    %220 = vmatprep.subr.mxu0 0.0
    %221 = vmatpush1.msra.mxu0 %v96
    %222 = vmatprep.subr.mxu0 0.0
    %223 = vmatpush1.msra.mxu0 %v95
    %224 = vmatprep.subr.mxu0 0.0
    %225 = vmatpush2.msra.mxu0 0.0
    %226 = vmatprep.subr.mxu0 0.0
    %227 = vmatpush2.msra.mxu0 0.0
    %228 = vmatprep.subr.mxu0 0.0
    %229 = vmatpush2.msra.mxu0 0.0
    %230 = vmatprep.subr.mxu0 0.0
    %231 = vmatpush2.msra.mxu0 0.0
    %232 = vmatprep.subr.mxu0 0.0
    %233 = vmatpush2.msra.mxu0 0.0
    %234 = vmatprep.subr.mxu0 0.0
    %235 = vmatpush2.msra.mxu0 0.0
    %236 = vmatprep.subr.mxu0 0.0
    %237 = vmatpush2.msra.mxu0 0.0
    %238 = vmatprep.subr.mxu0 0.0
    %239 = vmatpush2.msra.mxu0 0.0
    %240 = vmatprep.subr.mxu0 0.0
    %241 = vmatpush2.msra.mxu0 0.0
    %242 = vmatprep.subr.mxu0 0.0
    %243 = vmatpush2.msra.mxu0 0.0
    %244 = vmatprep.subr.mxu0 0.0
    %245 = vmatpush2.msra.mxu0 0.0
    %246 = vmatprep.subr.mxu0 0.0
    %247 = vmatpush2.msra.mxu0 0.0
    %248 = vmatprep.subr.mxu0 0.0
    %249 = vmatpush2.msra.mxu0 0.0
    %250 = vmatprep.subr.mxu0 0.0
    %251 = vmatpush2.msra.mxu0 0.0
    %252 = vmatprep.subr.mxu0 0.0
    %253 = vmatpush2.msra.mxu0 0.0
    %254 = vmatprep.subr.mxu0 0.0
    %255 = vmatpush2.msra.mxu0 0.0
    %256 = vmatprep.mubr.f32.mxu0 0.0
    %257 = vmatmul.mubr.f32.gmra.mxu0 %v187
    %v258 = vpop.f32.mrf.mxu0
    %v259 = vadd.f32 %v178, %v258
    %v260 = vpop.f32.mrf.mxu0
    %261 = vmatprep.mubr.f32.mxu0 0.0
    %262 = vmatmul.mubr.f32.gmra.mxu0 %v190
    %v263 = vpop.f32.mrf.mxu0
    %v264 = vadd.f32 %v183, %v263
    %v265 = vpop.f32.mrf.mxu0
    %266 = vdwg.mxu0
    %v267 = vmul.f32 %v259, 0.5
    %v268 = vmul.f32 %v264, 0.5
    %v269 = vmul.f32 %v259, 0.70710677
    %v270 = vmul.f32 %v264, 0.70710677
    %v271 = verf.f32.pop %v269
    %v272 = verf.f32.pop %v270
    %v273 = vadd.f32 %v271, 1.0
    %v274 = vadd.f32 %v272, 1.0
    %v275 = vmul.f32 %v267, %v273
    %v276 = vmul.f32 %v268, %v274
    %v277 = vsel %vm104, %v275, 0.0
    %278 = vadd.xlane.f32.xlu0 %v277
    %v279 = vpop.xlane.xlu0 %278
    %v280 = vsel %vm104, %v276, 0.0
    %281 = vadd.xlane.f32.xlu0 %v280
    %v282 = vpop.xlane.xlu0 %281
    %v283 = vrcp.pop 32.0
    %v284 = vmul.f32 %v279, %v283
    %v285 = vmul.f32 %v282, %v283
    %v286 = vmul.f32 %v275, %v275
    %v287 = vmul.f32 %v276, %v276
    %v288 = vsel %vm104, %v286, 0.0
    %289 = vadd.xlane.f32.xlu0 %v288
    %v290 = vpop.xlane.xlu0 %289
    %v291 = vsel %vm104, %v287, 0.0
    %292 = vadd.xlane.f32.xlu0 %v291
    %v293 = vpop.xlane.xlu0 %292
    %v294 = vmul.f32 %v290, %v283
    %v295 = vmul.f32 %v293, %v283
    %v296 = vmul.f32 %v284, %v284
    %v297 = vmul.f32 %v285, %v285
    %v298 = vsub.f32 %v294, %v296
    %v299 = vsub.f32 %v295, %v297
    %v300 = vmax.f32 %v298, 0.0
    %v301 = vmax.f32 %v299, 0.0
    %v302 = vsub.f32 %v275, %v284
    %v303 = vsub.f32 %v276, %v285
    %v304 = vadd.f32 %v300, 1e-12
    %v305 = vadd.f32 %v301, 1e-12
    %v306 = vrsqrt.pop %v304
    %v307 = vrsqrt.pop %v305
    %v308 = vmul.f32 %v302, %v306
    %v309 = vmul.f32 %v303, %v307
    %v310 = vlaneseq
    %v311 = vshrl.u32 %v310, 7
    %v312 = vsub.s32 0, %v311
    %v313 = vrot.slane %v94, %v312
    %v314 = vmul.f32 %v313, %v308
    %v315 = vmul.f32 %v313, %v309
    %v316 = vlaneseq
    %v317 = vshrl.u32 %v316, 7
    %v318 = vsub.s32 1, %v317
    %v319 = vrot.slane %v94, %v318
    %v320 = vadd.f32 %v314, %v319
    %v321 = vadd.f32 %v315, %v319
    %s322 = scalar_lea.vmem [#allocation7], 64
    %v323 = vld [vmem:[%s322] sm:$0xff]
    %v324 = vld [vmem:[%s322 + $0x8] sm:$0xff]
    %v325 = vld [vmem:[%s322 + $0x10] sm:$0xff]
    %v326 = vld [vmem:[%s322 + $0x18] sm:$0xff]
    %v328 = vsel %vm104, %v320, 0
    %v331 = vsel %vm104, %v321, 0
    %333 = vmatprep.subr.mxu0 0.0
    %334 = vmatpush1.msra.mxu0 0.0
    %335 = vmatprep.subr.mxu0 0.0
    %336 = vmatpush1.msra.mxu0 0.0
    %337 = vmatprep.subr.mxu0 0.0
    %338 = vmatpush1.msra.mxu0 0.0
    %339 = vmatprep.subr.mxu0 0.0
    %340 = vmatpush1.msra.mxu0 0.0
    %341 = vmatprep.subr.mxu0 0.0
    %342 = vmatpush1.msra.mxu0 0.0
    %343 = vmatprep.subr.mxu0 0.0
    %344 = vmatpush1.msra.mxu0 0.0
    %345 = vmatprep.subr.mxu0 0.0
    %346 = vmatpush1.msra.mxu0 0.0
    %347 = vmatprep.subr.mxu0 0.0
    %348 = vmatpush1.msra.mxu0 0.0
    %349 = vmatprep.subr.mxu0 0.0
    %350 = vmatpush1.msra.mxu0 0.0
    %351 = vmatprep.subr.mxu0 0.0
    %352 = vmatpush1.msra.mxu0 0.0
    %353 = vmatprep.subr.mxu0 0.0
    %354 = vmatpush1.msra.mxu0 0.0
    %355 = vmatprep.subr.mxu0 0.0
    %356 = vmatpush1.msra.mxu0 0.0
    %357 = vmatprep.subr.mxu0 0.0
    %358 = vmatpush1.msra.mxu0 %v326
    %359 = vmatprep.subr.mxu0 0.0
    %360 = vmatpush1.msra.mxu0 %v325
    %361 = vmatprep.subr.mxu0 0.0
    %362 = vmatpush1.msra.mxu0 %v324
    %363 = vmatprep.subr.mxu0 0.0
    %364 = vmatpush1.msra.mxu0 %v323
    %365 = vmatprep.subr.mxu0 0.0
    %366 = vmatpush2.msra.mxu0 0.0
    %367 = vmatprep.subr.mxu0 0.0
    %368 = vmatpush2.msra.mxu0 0.0
    %369 = vmatprep.subr.mxu0 0.0
    %370 = vmatpush2.msra.mxu0 0.0
    %371 = vmatprep.subr.mxu0 0.0
    %372 = vmatpush2.msra.mxu0 0.0
    %373 = vmatprep.subr.mxu0 0.0
    %374 = vmatpush2.msra.mxu0 0.0
    %375 = vmatprep.subr.mxu0 0.0
    %376 = vmatpush2.msra.mxu0 0.0
    %377 = vmatprep.subr.mxu0 0.0
    %378 = vmatpush2.msra.mxu0 0.0
    %379 = vmatprep.subr.mxu0 0.0
    %380 = vmatpush2.msra.mxu0 0.0
    %381 = vmatprep.subr.mxu0 0.0
    %382 = vmatpush2.msra.mxu0 0.0
    %383 = vmatprep.subr.mxu0 0.0
    %384 = vmatpush2.msra.mxu0 0.0
    %385 = vmatprep.subr.mxu0 0.0
    %386 = vmatpush2.msra.mxu0 0.0
    %387 = vmatprep.subr.mxu0 0.0
    %388 = vmatpush2.msra.mxu0 0.0
    %389 = vmatprep.subr.mxu0 0.0
    %390 = vmatpush2.msra.mxu0 0.0
    %391 = vmatprep.subr.mxu0 0.0
    %392 = vmatpush2.msra.mxu0 0.0
    %393 = vmatprep.subr.mxu0 0.0
    %394 = vmatpush2.msra.mxu0 0.0
    %395 = vmatprep.subr.mxu0 0.0
    %396 = vmatpush2.msra.mxu0 0.0
    %397 = vmatprep.mubr.f32.mxu0 0.0
    %398 = vmatmul.mubr.f32.gmra.mxu0 %v328
    %v399 = vpop.f32.mrf.mxu0
    %v400 = vadd.f32 0.0, %v399
    %v401 = vpop.f32.mrf.mxu0
    %402 = vmatprep.mubr.f32.mxu0 0.0
    %403 = vmatmul.mubr.f32.gmra.mxu0 %v331
    %v404 = vpop.f32.mrf.mxu0
    %v405 = vadd.f32 0.0, %v404
    %v406 = vpop.f32.mrf.mxu0
    %407 = vdwg.mxu0
    %v408 = vmul.f32 %v400, 0.5
    %v409 = vmul.f32 %v405, 0.5
    %v410 = vmul.f32 %v400, 0.70710677
    %v411 = vmul.f32 %v405, 0.70710677
    %v412 = verf.f32.pop %v410
    %v413 = verf.f32.pop %v411
    %v414 = vadd.f32 %v412, 1.0
    %v415 = vadd.f32 %v413, 1.0
    %v416 = vmul.f32 %v408, %v414
    %v417 = vmul.f32 %v409, %v415
    %v418 = vsel %vm104, %v416, 0.0
    %419 = vadd.xlane.f32.xlu0 %v418
    %v420 = vpop.xlane.xlu0 %419
    %v421 = vsel %vm104, %v417, 0.0
    %422 = vadd.xlane.f32.xlu0 %v421
    %v423 = vpop.xlane.xlu0 %422
    %v424 = vmul.f32 %v420, %v283
    %v425 = vmul.f32 %v423, %v283
    %v426 = vmul.f32 %v416, %v416
    %v427 = vmul.f32 %v417, %v417
    %v428 = vsel %vm104, %v426, 0.0
    %429 = vadd.xlane.f32.xlu0 %v428
    %v430 = vpop.xlane.xlu0 %429
    %v431 = vsel %vm104, %v427, 0.0
    %432 = vadd.xlane.f32.xlu0 %v431
    %v433 = vpop.xlane.xlu0 %432
    %v434 = vmul.f32 %v430, %v283
    %v435 = vmul.f32 %v433, %v283
    %v436 = vmul.f32 %v424, %v424
    %v437 = vmul.f32 %v425, %v425
    %v438 = vsub.f32 %v434, %v436
    %v439 = vsub.f32 %v435, %v437
    %v440 = vmax.f32 %v438, 0.0
    %v441 = vmax.f32 %v439, 0.0
    %v442 = vsub.f32 %v416, %v424
    %v443 = vsub.f32 %v417, %v425
    %v444 = vadd.f32 %v440, 1e-12
    %v445 = vadd.f32 %v441, 1e-12
    %v446 = vrsqrt.pop %v444
    %v447 = vrsqrt.pop %v445
    %v448 = vmul.f32 %v442, %v446
    %v449 = vmul.f32 %v443, %v447
    %v450 = vlaneseq
    %v451 = vshrl.u32 %v450, 7
    %v452 = vsub.s32 2, %v451
    %v453 = vrot.slane %v94, %v452
    %v454 = vmul.f32 %v453, %v448
    %v455 = vmul.f32 %v453, %v449
    %v456 = vlaneseq
    %v457 = vshrl.u32 %v456, 7
    %v458 = vsub.s32 3, %v457
    %v459 = vrot.slane %v94, %v458
    %v460 = vadd.f32 %v454, %v459
    %v461 = vadd.f32 %v455, %v459
    %s462 = scalar_lea.vmem [#allocation7], 96
    %v463 = vld [vmem:[%s462] sm:$0xff]
    %v464 = vld [vmem:[%s462 + $0x8] sm:$0xff]
    %v465 = vld [vmem:[%s462 + $0x10] sm:$0xff]
    %v466 = vld [vmem:[%s462 + $0x18] sm:$0xff]
    %v467 = vlaneseq
    %v468 = vshrl.u32 %v467, 7
    %v469 = vsub.s32 4, %v468
    %v470 = vrot.slane %v94, %v469
    %v472 = vsel %vm104, %v460, 0
    %v475 = vsel %vm104, %v461, 0
    %477 = vmatprep.subr.mxu0 0.0
    %478 = vmatpush1.msra.mxu0 0.0
    %479 = vmatprep.subr.mxu0 0.0
    %480 = vmatpush1.msra.mxu0 0.0
    %481 = vmatprep.subr.mxu0 0.0
    %482 = vmatpush1.msra.mxu0 0.0
    %483 = vmatprep.subr.mxu0 0.0
    %484 = vmatpush1.msra.mxu0 0.0
    %485 = vmatprep.subr.mxu0 0.0
    %486 = vmatpush1.msra.mxu0 0.0
    %487 = vmatprep.subr.mxu0 0.0
    %488 = vmatpush1.msra.mxu0 0.0
    %489 = vmatprep.subr.mxu0 0.0
    %490 = vmatpush1.msra.mxu0 0.0
    %491 = vmatprep.subr.mxu0 0.0
    %492 = vmatpush1.msra.mxu0 0.0
    %493 = vmatprep.subr.mxu0 0.0
    %494 = vmatpush1.msra.mxu0 0.0
    %495 = vmatprep.subr.mxu0 0.0
    %496 = vmatpush1.msra.mxu0 0.0
    %497 = vmatprep.subr.mxu0 0.0
    %498 = vmatpush1.msra.mxu0 0.0
    %499 = vmatprep.subr.mxu0 0.0
    %500 = vmatpush1.msra.mxu0 0.0
    %501 = vmatprep.subr.mxu0 0.0
    %502 = vmatpush1.msra.mxu0 %v466
    %503 = vmatprep.subr.mxu0 0.0
    %504 = vmatpush1.msra.mxu0 %v465
    %505 = vmatprep.subr.mxu0 0.0
    %506 = vmatpush1.msra.mxu0 %v464
    %507 = vmatprep.subr.mxu0 0.0
    %508 = vmatpush1.msra.mxu0 %v463
    %509 = vmatprep.subr.mxu0 0.0
    %510 = vmatpush2.msra.mxu0 0.0
    %511 = vmatprep.subr.mxu0 0.0
    %512 = vmatpush2.msra.mxu0 0.0
    %513 = vmatprep.subr.mxu0 0.0
    %514 = vmatpush2.msra.mxu0 0.0
    %515 = vmatprep.subr.mxu0 0.0
    %516 = vmatpush2.msra.mxu0 0.0
    %517 = vmatprep.subr.mxu0 0.0
    %518 = vmatpush2.msra.mxu0 0.0
    %519 = vmatprep.subr.mxu0 0.0
    %520 = vmatpush2.msra.mxu0 0.0
    %521 = vmatprep.subr.mxu0 0.0
    %522 = vmatpush2.msra.mxu0 0.0
    %523 = vmatprep.subr.mxu0 0.0
    %524 = vmatpush2.msra.mxu0 0.0
    %525 = vmatprep.subr.mxu0 0.0
    %526 = vmatpush2.msra.mxu0 0.0
    %527 = vmatprep.subr.mxu0 0.0
    %528 = vmatpush2.msra.mxu0 0.0
    %529 = vmatprep.subr.mxu0 0.0
    %530 = vmatpush2.msra.mxu0 0.0
    %531 = vmatprep.subr.mxu0 0.0
    %532 = vmatpush2.msra.mxu0 0.0
    %533 = vmatprep.subr.mxu0 0.0
    %534 = vmatpush2.msra.mxu0 0.0
    %535 = vmatprep.subr.mxu0 0.0
    %536 = vmatpush2.msra.mxu0 0.0
    %537 = vmatprep.subr.mxu0 0.0
    %538 = vmatpush2.msra.mxu0 0.0
    %539 = vmatprep.subr.mxu0 0.0
    %540 = vmatpush2.msra.mxu0 0.0
    %541 = vmatprep.mubr.f32.mxu0 0.0
    %542 = vmatmul.mubr.f32.gmra.mxu0 %v472
    %v543 = vpop.f32.mrf.mxu0
    %v544 = vadd.f32 %v470, %v543
    %v545 = vpop.f32.mrf.mxu0
    %546 = vmatprep.mubr.f32.mxu0 0.0
    %547 = vmatmul.mubr.f32.gmra.mxu0 %v475
    %v548 = vpop.f32.mrf.mxu0
    %v549 = vadd.f32 %v470, %v548
    %v550 = vpop.f32.mrf.mxu0
    %551 = vdwg.mxu0
    %v552 = vmul.f32 %v544, 0.5
    %v553 = vmul.f32 %v549, 0.5
    %v554 = vmul.f32 %v544, 0.70710677
    %v555 = vmul.f32 %v549, 0.70710677
    %v556 = verf.f32.pop %v554
    %v557 = verf.f32.pop %v555
    %v558 = vadd.f32 %v556, 1.0
    %v559 = vadd.f32 %v557, 1.0
    %v560 = vmul.f32 %v552, %v558
    %v561 = vmul.f32 %v553, %v559
    %v562 = vsel %vm104, %v560, 0.0
    %563 = vadd.xlane.f32.xlu0 %v562
    %v564 = vpop.xlane.xlu0 %563
    %v565 = vsel %vm104, %v561, 0.0
    %566 = vadd.xlane.f32.xlu0 %v565
    %v567 = vpop.xlane.xlu0 %566
    %v568 = vmul.f32 %v564, %v283
    %v569 = vmul.f32 %v567, %v283
    %v570 = vmul.f32 %v560, %v560
    %v571 = vmul.f32 %v561, %v561
    %v572 = vsel %vm104, %v570, 0.0
    %573 = vadd.xlane.f32.xlu0 %v572
    %v574 = vpop.xlane.xlu0 %573
    %v575 = vsel %vm104, %v571, 0.0
    %576 = vadd.xlane.f32.xlu0 %v575
    %v577 = vpop.xlane.xlu0 %576
    %v578 = vmul.f32 %v574, %v283
    %v579 = vmul.f32 %v577, %v283
    %v580 = vmul.f32 %v568, %v568
    %v581 = vmul.f32 %v569, %v569
    %v582 = vsub.f32 %v578, %v580
    %v583 = vsub.f32 %v579, %v581
    %v584 = vmax.f32 %v582, 0.0
    %v585 = vmax.f32 %v583, 0.0
    %v586 = vsub.f32 %v560, %v568
    %v587 = vsub.f32 %v561, %v569
    %v588 = vadd.f32 %v584, 1e-12
    %v589 = vadd.f32 %v585, 1e-12
    %v590 = vrsqrt.pop %v588
    %v591 = vrsqrt.pop %v589
    %v592 = vmul.f32 %v586, %v590
    %v593 = vmul.f32 %v587, %v591
    %v594 = vlaneseq
    %v595 = vshrl.u32 %v594, 7
    %v596 = vsub.s32 5, %v595
    %v597 = vrot.slane %v94, %v596
    %v598 = vmul.f32 %v597, %v592
    %v599 = vmul.f32 %v597, %v593
    %v600 = vlaneseq
    %v601 = vshrl.u32 %v600, 7
    %v602 = vsub.s32 6, %v601
    %v603 = vrot.slane %v94, %v602
    %v604 = vadd.f32 %v598, %v603
    %v605 = vadd.f32 %v599, %v603
    %v606 = vld [vmem:[#allocation10] sm:$0xff]
    %v607 = vld [vmem:[#allocation10 + $0x8] sm:$0xff]
    %v608 = vld [vmem:[#allocation10 + $0x10] sm:$0xff]
    %v609 = vld [vmem:[#allocation10 + $0x18] sm:$0xff]
    %v610 = vld [vmem:[%s5] sm:$0x1]
    %v612 = vlaneseq
    %v613 = vshrl.u32 %v612, 7
    %v614 = vsub.s32 0, %v613
    %v615 = vrot.slane %v610, %v614
    %v618 = vsel %vm104, %v604, 0
    %v621 = vsel %vm104, %v605, 0
    %623 = vmatprep.subr.mxu0 0.0
    %624 = vmatpush1.msra.mxu0 0.0
    %625 = vmatprep.subr.mxu0 0.0
    %626 = vmatpush1.msra.mxu0 0.0
    %627 = vmatprep.subr.mxu0 0.0
    %628 = vmatpush1.msra.mxu0 0.0
    %629 = vmatprep.subr.mxu0 0.0
    %630 = vmatpush1.msra.mxu0 0.0
    %631 = vmatprep.subr.mxu0 0.0
    %632 = vmatpush1.msra.mxu0 0.0
    %633 = vmatprep.subr.mxu0 0.0
    %634 = vmatpush1.msra.mxu0 0.0
    %635 = vmatprep.subr.mxu0 0.0
    %636 = vmatpush1.msra.mxu0 0.0
    %637 = vmatprep.subr.mxu0 0.0
    %638 = vmatpush1.msra.mxu0 0.0
    %639 = vmatprep.subr.mxu0 0.0
    %640 = vmatpush1.msra.mxu0 0.0
    %641 = vmatprep.subr.mxu0 0.0
    %642 = vmatpush1.msra.mxu0 0.0
    %643 = vmatprep.subr.mxu0 0.0
    %644 = vmatpush1.msra.mxu0 0.0
    %645 = vmatprep.subr.mxu0 0.0
    %646 = vmatpush1.msra.mxu0 0.0
    %647 = vmatprep.subr.mxu0 0.0
    %648 = vmatpush1.msra.mxu0 %v609
    %649 = vmatprep.subr.mxu0 0.0
    %650 = vmatpush1.msra.mxu0 %v608
    %651 = vmatprep.subr.mxu0 0.0
    %652 = vmatpush1.msra.mxu0 %v607
    %653 = vmatprep.subr.mxu0 0.0
    %654 = vmatpush1.msra.mxu0 %v606
    %655 = vmatprep.subr.mxu0 0.0
    %656 = vmatpush2.msra.mxu0 0.0
    %657 = vmatprep.subr.mxu0 0.0
    %658 = vmatpush2.msra.mxu0 0.0
    %659 = vmatprep.subr.mxu0 0.0
    %660 = vmatpush2.msra.mxu0 0.0
    %661 = vmatprep.subr.mxu0 0.0
    %662 = vmatpush2.msra.mxu0 0.0
    %663 = vmatprep.subr.mxu0 0.0
    %664 = vmatpush2.msra.mxu0 0.0
    %665 = vmatprep.subr.mxu0 0.0
    %666 = vmatpush2.msra.mxu0 0.0
    %667 = vmatprep.subr.mxu0 0.0
    %668 = vmatpush2.msra.mxu0 0.0
    %669 = vmatprep.subr.mxu0 0.0
    %670 = vmatpush2.msra.mxu0 0.0
    %671 = vmatprep.subr.mxu0 0.0
    %672 = vmatpush2.msra.mxu0 0.0
    %673 = vmatprep.subr.mxu0 0.0
    %674 = vmatpush2.msra.mxu0 0.0
    %675 = vmatprep.subr.mxu0 0.0
    %676 = vmatpush2.msra.mxu0 0.0
    %677 = vmatprep.subr.mxu0 0.0
    %678 = vmatpush2.msra.mxu0 0.0
    %679 = vmatprep.subr.mxu0 0.0
    %680 = vmatpush2.msra.mxu0 0.0
    %681 = vmatprep.subr.mxu0 0.0
    %682 = vmatpush2.msra.mxu0 0.0
    %683 = vmatprep.subr.mxu0 0.0
    %684 = vmatpush2.msra.mxu0 0.0
    %685 = vmatprep.subr.mxu0 0.0
    %686 = vmatpush2.msra.mxu0 0.0
    %687 = vmatprep.mubr.f32.mxu0 0.0
    %688 = vmatmul.mubr.f32.gmra.mxu0 %v618
    %v689 = vpop.f32.mrf.mxu0
    %v690 = vadd.f32 %v615, %v689
    %v691 = vpop.f32.mrf.mxu0
    %692 = vmatprep.mubr.f32.mxu0 0.0
    %693 = vmatmul.mubr.f32.gmra.mxu0 %v621
    %v694 = vpop.f32.mrf.mxu0
    %v695 = vadd.f32 %v615, %v694
    %v696 = vpop.f32.mrf.mxu0
    %697 = vdwg.mxu0
    %698 = vst [vmem:[#allocation11] sm:$0xff] %v690
    %699 = vst [vmem:[#allocation11 + $0x8] sm:$0xff] %v695
    // Predicated region
    $region46: #{tpu_custom_call.1} parent=1 // pred_check
      _
    $region47: #{tpu_custom_call.1} parent=1 // pred_check_branch
      %701 = sbr.rel (0) target = $region49
    $region48: #{tpu_custom_call.1} parent=1 // pred_region
      %s703 = ssub.s32 256, 256
      %704 = vsyncadd [#allocation4], %s703
      %s705 = sshll.u32 [#allocation11], 4
      %s706 = int_to_ptr.vmem [resolvable:$true] %s705
      %711 = dma.vmem_to_hbm [thread:$0]  %s706, 256, %s6, [#allocation4], 128, 128, 8
    $region49: #{tpu_custom_call.1} parent=1 // pred_fallthru
      _
    // Predicated region
    $region50: #{tpu_custom_call.1} parent=1 // pred_check
      _
    $region51: #{tpu_custom_call.1} parent=1 // pred_check_branch
      %713 = sbr.rel (0) target = $region53
    $region52: #{tpu_custom_call.1} parent=1 // pred_region
      %714 = dma.done [#allocation4], 256
    $region53: #{tpu_custom_call.1} parent=1 // pred_fallthru
      _
    %715 = vsyncpa [#allocation3], 1
    %716 = vsyncpa [#allocation6], 1
    %717 = vsyncpa [#allocation9], 1
    %718 = vsyncpa [#allocation4], 1

</llo_original>
